<compile_context>
chip_gen: v7x
topology: tpu7x:2x2x1
jax: 0.10.0
libtpu: 0.0.40
codegen_flags: <defaults>
</compile_context>

<pallas_src>
import functools

import jax
import jax.numpy as jnp
from jax import lax
from jax.experimental import pallas as pl
from jax.experimental.pallas import tpu as pltpu

_NEG_BIG = -1e30  # finite "-inf" stand-in: avoids inf-inf -> NaN in online updates


def _ce_label_smooth_kernel(x_ref, o_ref, m_ref, l_ref, sx_ref, *,
                            epsilon, num_classes, batch, tb, tk,
                            k_tail_valid, mask_k_tail, mask_b_tail):
    i = pl.program_id(0)           # batch-tile index (parallel)
    k = pl.program_id(1)           # class-tile index (reduction, innermost)
    nk = pl.num_programs(1)

    # ---- reset per-row online state at the start of every batch tile
    @pl.when(k == 0)
    def _init():
        m_ref[...] = jnp.full_like(m_ref, _NEG_BIG)
        l_ref[...] = jnp.zeros_like(l_ref)
        sx_ref[...] = jnp.zeros_like(sx_ref)

    x = x_ref[...].astype(jnp.float32)        # (tb, tk) logits tile, f32 math

    def _update(x_lse, x_sum):
        # online logsumexp (running max m, running sum-of-exp l) + running sum of logits
        m_old = m_ref[...]
        m_new = jnp.maximum(m_old, jnp.max(x_lse, axis=1, keepdims=True))
        p = jnp.exp(x_lse - m_new)            # masked lanes underflow to 0
        l_ref[...] = jnp.exp(m_old - m_new) * l_ref[...] + jnp.sum(p, axis=1, keepdims=True)
        m_ref[...] = m_new
        sx_ref[...] = sx_ref[...] + jnp.sum(x_sum, axis=1, keepdims=True)

    if mask_k_tail:
        # Only the last class tile carries padded columns: keep iota/compare/
        # select work off the interior fast path.
        @pl.when(k != nk - 1)
        def _fast():
            _update(x, x)

        @pl.when(k == nk - 1)
        def _tail():
            col = lax.broadcasted_iota(jnp.int32, (tb, tk), 1)
            valid = col < k_tail_valid        # static tail width
            _update(jnp.where(valid, x, _NEG_BIG), jnp.where(valid, x, 0.0))
    else:
        _update(x, x)

    # ---- finalize this batch tile: per-row value, reduce, emit partial sum.
    # Padded batch rows (last batch tile only) may hold garbage/NaN stats;
    # the (tb,1) select below zeroes them, so no per-element row masking is
    # needed on the hot path.
    @pl.when(k == nk - 1)
    def _finalize():
        lse = m_ref[...] + jnp.log(l_ref[...])                      # (tb, 1)
        row_val = lse - (epsilon / num_classes) * sx_ref[...]       # (tb, 1)
        if mask_b_tail:
            row_ids = i * tb + lax.broadcasted_iota(jnp.int32, (tb, 1), 0)
            row_val = jnp.where(row_ids < batch, row_val, 0.0)
        partial = jnp.sum(row_val)                                  # scalar f32
        o_ref[...] = jnp.broadcast_to(partial, o_ref.shape).astype(jnp.float32)


def _choose_class_tile(k_dim, tk_max):
    """Full K in one block if it fits; else the largest 128-multiple <= tk_max."""
    if k_dim <= tk_max:
        return int(k_dim)
    return int(max(128, (tk_max // 128) * 128))


def _choose_batch_tile(b_dim, tb_max):
    """Multiple-of-8 batch tile. When B fits in one tile but B >= 16, split into
    >= 2 tiles so the 'parallel' axis can shard across v7x's two TensorCores."""
    if b_dim < 16:
        return int(b_dim)                       # full-dim block (always legal)
    cap = max(8, (tb_max // 8) * 8)
    if b_dim <= cap:
        half = (((b_dim + 1) // 2) + 7) // 8 * 8
        return int(min(half, cap))
    return int(cap)


def cross_entropy_label_smooth(inputs, targets, num_classes, epsilon=0.1,
                               tb_max=256, tk_max=4096):
    """inputs: (B, K) float logits; targets: (B,) int class ids. Returns scalar f32 loss."""
    B, K = inputs.shape
    assert K == num_classes
    tb = _choose_batch_tile(B, tb_max)
    tk = _choose_class_tile(K, tk_max)
    nbt = pl.cdiv(B, tb)
    nkt = pl.cdiv(K, tk)
    k_tail_valid = K - (nkt - 1) * tk            # static; == tk when K % tk == 0
    mask_k_tail = k_tail_valid < tk
    mask_b_tail = (B % tb) != 0

    kernel = functools.partial(
        _ce_label_smooth_kernel,
        epsilon=float(epsilon), num_classes=int(num_classes), batch=int(B),
        tb=int(tb), tk=int(tk), k_tail_valid=int(k_tail_valid),
        mask_k_tail=bool(mask_k_tail), mask_b_tail=bool(mask_b_tail))

    itemsize = inputs.dtype.itemsize
    block_bytes = tb * tk * itemsize
    # Double-buffered logits block + headroom; floor at the usual scoped default,
    # cap at 64 MiB so v7x (64 MiB physical VMEM) stays safe.
    vmem_bytes = int(min(max(2 * block_bytes + (4 << 20), 32 << 20), 64 << 20))

    cost = pl.CostEstimate(
        flops=5 * B * K,
        transcendentals=B * K,
        bytes_accessed=B * K * itemsize + nbt * 8 * 128 * 4)

    partials = pl.pallas_call(
        kernel,
        out_shape=jax.ShapeDtypeStruct((nbt, 8, 128), jnp.float32),
        grid_spec=pltpu.PrefetchScalarGridSpec(
            num_scalar_prefetch=0,
            grid=(nbt, nkt),                     # batch outer (parallel), K reduction last
            in_specs=[
                # logits: streamed lane-dense tiles, auto double-buffered
                pl.BlockSpec((tb, tk), lambda i, k: (i, k)),
            ],
            # per-batch-tile partial sums in an (8,128)-aligned, lane-dense block
            out_specs=pl.BlockSpec((1, 8, 128), lambda i, k: (i, 0, 0)),
            scratch_shapes=[
                pltpu.VMEM((tb, 1), jnp.float32),   # running max
                pltpu.VMEM((tb, 1), jnp.float32),   # running sum-of-exp
                pltpu.VMEM((tb, 1), jnp.float32),   # running sum of logits
            ],
        ),
        compiler_params=pltpu.CompilerParams(
            dimension_semantics=("parallel", "arbitrary"),
            vmem_limit_bytes=vmem_bytes),
        cost_estimate=cost,
    )(inputs)

    # Label term folded in outside the kernel: B-element gather, negligible HBM.
    label_logits = jnp.take_along_axis(
        inputs, targets.astype(jnp.int32).reshape(B, 1), axis=1).astype(jnp.float32)
    total = jnp.sum(partials[:, 0, 0]) - (1.0 - float(epsilon)) * jnp.sum(label_logits)
    # mean(0).sum() == total / B ; divide exactly once.
    return total / B


def _reference(inputs, targets, num_classes, epsilon=0.1):
    log_probs = jax.nn.log_softmax(inputs.astype(jnp.float32), axis=1)
    onehot = jax.nn.one_hot(targets, num_classes, dtype=jnp.float32)
    smoothed = (1.0 - epsilon) * onehot + epsilon / num_classes
    return jnp.sum(jnp.mean(-smoothed * log_probs, axis=0))


if __name__ == "__main__":
    key = jax.random.PRNGKey(0)
    k1, k2, k3, k4, k5, k6 = jax.random.split(key, 6)

    # Case 1: small shapes consistent with the module (single-tile fast path).
    B, K = 8, 32
    logits = jax.random.normal(k1, (B, K), dtype=jnp.float32)
    labels = jax.random.randint(k2, (B,), 0, K, dtype=jnp.int32)
    loss = jax.block_until_ready(
        cross_entropy_label_smooth(logits, labels, num_classes=K, epsilon=0.1))
    ref = _reference(logits, labels, num_classes=K, epsilon=0.1)
    assert jnp.allclose(loss, ref, atol=1e-5, rtol=1e-5), (loss, ref)

    # Case 2: interior fast tiles + masked K tail + padded batch tail.
    B2, K2 = 20, 200
    logits2 = jax.random.normal(k3, (B2, K2), dtype=jnp.float32) * 3.0
    labels2 = jax.random.randint(k4, (B2,), 0, K2, dtype=jnp.int32)
    loss2 = jax.block_until_ready(
        cross_entropy_label_smooth(logits2, labels2, num_classes=K2, epsilon=0.1,
                                   tb_max=16, tk_max=128))
    ref2 = _reference(logits2, labels2, num_classes=K2, epsilon=0.1)
    assert jnp.allclose(loss2, ref2, atol=1e-4, rtol=1e-4), (loss2, ref2)

    # Case 3: bf16 logits, >=2 batch tiles (v7x 2-TC sharding path), full-K block.
    B3, K3 = 64, 1000
    logits3 = (jax.random.normal(k5, (B3, K3), dtype=jnp.float32) * 2.0).astype(jnp.bfloat16)
    labels3 = jax.random.randint(k6, (B3,), 0, K3, dtype=jnp.int32)
    loss3 = jax.block_until_ready(
        cross_entropy_label_smooth(logits3, labels3, num_classes=K3, epsilon=0.1))
    ref3 = _reference(logits3, labels3, num_classes=K3, epsilon=0.1)
    assert jnp.allclose(loss3, ref3, atol=1e-3, rtol=1e-3), (loss3, ref3)

    print("KERNEL_OK")
</pallas_src>

<mosaic_0001>
module attributes {stable_mosaic.version = 11 : i64} {
  func.func @_ce_label_smooth_kernel(%arg0: i32, %arg1: i32, %arg2: memref<8x32xf32, #tpu.memory_space<vmem>>, %arg3: memref<1x8x128xf32, #tpu.memory_space<vmem>>, %arg4: memref<8x1xf32, #tpu.memory_space<vmem>>, %arg5: memref<8x1xf32, #tpu.memory_space<vmem>>, %arg6: memref<8x1xf32, #tpu.memory_space<vmem>>) attributes {dimension_semantics = [#tpu.dimension_semantics<parallel>, #tpu.dimension_semantics<arbitrary>], iteration_bounds = array<i64: 1, 1>, scalar_prefetch = 0 : i64, scratch_operands = 3 : i64, tpu.core_type = #tpu.core_type<tc>, window_params = [{transform_indices = @transform_0, window_bounds = array<i64: 8, 32>}, {transform_indices = @transform_1, window_bounds = array<i64: 1, 8, 128>}]} {
    %c0_i32 = arith.constant 0 : i32
    %0 = arith.cmpi eq, %arg1, %c0_i32 : i32
    %1 = arith.extui %0 : i1 to i32
    %c0_i32_0 = arith.constant 0 : i32
    %2 = arith.cmpi ne, %1, %c0_i32_0 : i32
    scf.if %2 {
      %cst_18 = arith.constant -1.000000e+30 : f32
      %28 = vector.broadcast %cst_18 : f32 to vector<8x1xf32>
      %c0_19 = arith.constant 0 : index
      %c0_20 = arith.constant 0 : index
      %29 = vector.load %arg4[%c0_19, %c0_20] : memref<8x1xf32, #tpu.memory_space<vmem>>, vector<8x1xf32>
      tpu.vector_store %arg4[%c0_19, %c0_20], %28 {strides = array<i32>} : memref<8x1xf32, #tpu.memory_space<vmem>>, vector<8x1xf32>,
      %cst_21 = arith.constant 0.000000e+00 : f32
      %30 = vector.broadcast %cst_21 : f32 to vector<8x1xf32>
      %c0_22 = arith.constant 0 : index
      %c0_23 = arith.constant 0 : index
      %31 = vector.load %arg5[%c0_22, %c0_23] : memref<8x1xf32, #tpu.memory_space<vmem>>, vector<8x1xf32>
      tpu.vector_store %arg5[%c0_22, %c0_23], %30 {strides = array<i32>} : memref<8x1xf32, #tpu.memory_space<vmem>>, vector<8x1xf32>,
      %cst_24 = arith.constant 0.000000e+00 : f32
      %32 = vector.broadcast %cst_24 : f32 to vector<8x1xf32>
      %c0_25 = arith.constant 0 : index
      %c0_26 = arith.constant 0 : index
      %33 = vector.load %arg6[%c0_25, %c0_26] : memref<8x1xf32, #tpu.memory_space<vmem>>, vector<8x1xf32>
      tpu.vector_store %arg6[%c0_25, %c0_26], %32 {strides = array<i32>} : memref<8x1xf32, #tpu.memory_space<vmem>>, vector<8x1xf32>,
    } else {
    }
    %c0 = arith.constant 0 : index
    %c0_1 = arith.constant 0 : index
    %3 = vector.load %arg2[%c0, %c0_1] : memref<8x32xf32, #tpu.memory_space<vmem>>, vector<8x32xf32>
    %c0_2 = arith.constant 0 : index
    %c0_3 = arith.constant 0 : index
    %4 = vector.load %arg4[%c0_2, %c0_3] : memref<8x1xf32, #tpu.memory_space<vmem>>, vector<8x1xf32>
    %cst = arith.constant dense<0xFF800000> : vector<8xf32>
    %5 = vector.multi_reduction <maximumf>, %3, %cst [1] : vector<8x32xf32> to vector<8xf32>
    %6 = vector.shape_cast %5 : vector<8xf32> to vector<8x1xf32>
    %7 = arith.maximumf %4, %6 : vector<8x1xf32>
    %8 = vector.broadcast %7 : vector<8x1xf32> to vector<8x32xf32>
    %9 = arith.subf %3, %8 : vector<8x32xf32>
    %10 = math.exp %9 : vector<8x32xf32>
    %11 = arith.subf %4, %7 : vector<8x1xf32>
    %12 = math.exp %11 : vector<8x1xf32>
    %c0_4 = arith.constant 0 : index
    %c0_5 = arith.constant 0 : index
    %13 = vector.load %arg5[%c0_4, %c0_5] : memref<8x1xf32, #tpu.memory_space<vmem>>, vector<8x1xf32>
    %14 = arith.mulf %12, %13 : vector<8x1xf32>
    %cst_6 = arith.constant dense<0.000000e+00> : vector<8xf32>
    %15 = vector.multi_reduction <add>, %10, %cst_6 [1] : vector<8x32xf32> to vector<8xf32>
    %16 = vector.shape_cast %15 : vector<8xf32> to vector<8x1xf32>
    %17 = arith.addf %14, %16 : vector<8x1xf32>
    %c0_7 = arith.constant 0 : index
    %c0_8 = arith.constant 0 : index
    %18 = vector.load %arg5[%c0_7, %c0_8] : memref<8x1xf32, #tpu.memory_space<vmem>>, vector<8x1xf32>
    tpu.vector_store %arg5[%c0_7, %c0_8], %17 {strides = array<i32>} : memref<8x1xf32, #tpu.memory_space<vmem>>, vector<8x1xf32>,
    %c0_9 = arith.constant 0 : index
    %c0_10 = arith.constant 0 : index
    %19 = vector.load %arg4[%c0_9, %c0_10] : memref<8x1xf32, #tpu.memory_space<vmem>>, vector<8x1xf32>
    tpu.vector_store %arg4[%c0_9, %c0_10], %7 {strides = array<i32>} : memref<8x1xf32, #tpu.memory_space<vmem>>, vector<8x1xf32>,
    %c0_11 = arith.constant 0 : index
    %c0_12 = arith.constant 0 : index
    %20 = vector.load %arg6[%c0_11, %c0_12] : memref<8x1xf32, #tpu.memory_space<vmem>>, vector<8x1xf32>
    %cst_13 = arith.constant dense<0.000000e+00> : vector<8xf32>
    %21 = vector.multi_reduction <add>, %3, %cst_13 [1] : vector<8x32xf32> to vector<8xf32>
    %22 = vector.shape_cast %21 : vector<8xf32> to vector<8x1xf32>
    %23 = arith.addf %20, %22 : vector<8x1xf32>
    %c0_14 = arith.constant 0 : index
    %c0_15 = arith.constant 0 : index
    %24 = vector.load %arg6[%c0_14, %c0_15] : memref<8x1xf32, #tpu.memory_space<vmem>>, vector<8x1xf32>
    tpu.vector_store %arg6[%c0_14, %c0_15], %23 {strides = array<i32>} : memref<8x1xf32, #tpu.memory_space<vmem>>, vector<8x1xf32>,
    %c0_i32_16 = arith.constant 0 : i32
    %25 = arith.cmpi eq, %arg1, %c0_i32_16 : i32
    %26 = arith.extui %25 : i1 to i32
    %c0_i32_17 = arith.constant 0 : i32
    %27 = arith.cmpi ne, %26, %c0_i32_17 : i32
    scf.if %27 {
      %c0_18 = arith.constant 0 : index
      %c0_19 = arith.constant 0 : index
      %28 = vector.load %arg4[%c0_18, %c0_19] : memref<8x1xf32, #tpu.memory_space<vmem>>, vector<8x1xf32>
      %c0_20 = arith.constant 0 : index
      %c0_21 = arith.constant 0 : index
      %29 = vector.load %arg5[%c0_20, %c0_21] : memref<8x1xf32, #tpu.memory_space<vmem>>, vector<8x1xf32>
      %30 = math.log %29 : vector<8x1xf32>
      %31 = arith.addf %28, %30 : vector<8x1xf32>
      %c0_22 = arith.constant 0 : index
      %c0_23 = arith.constant 0 : index
      %32 = vector.load %arg6[%c0_22, %c0_23] : memref<8x1xf32, #tpu.memory_space<vmem>>, vector<8x1xf32>
      %cst_24 = arith.constant 3.125000e-03 : f32
      %33 = vector.broadcast %cst_24 : f32 to vector<8x1xf32>
      %34 = arith.mulf %33, %32 : vector<8x1xf32>
      %35 = arith.subf %31, %34 : vector<8x1xf32>
      %36 = vector.shape_cast %35 : vector<8x1xf32> to vector<1x8x1xf32>
      %cst_25 = arith.constant dense<0.000000e+00> : vector<1xf32>
      %37 = vector.multi_reduction <add>, %36, %cst_25 [1, 2] : vector<1x8x1xf32> to vector<1xf32>
      %38 = vector.shape_cast %37 : vector<1xf32> to vector<1x1x1xf32>
      %39 = vector.extract %38[0, 0, 0] : f32 from vector<1x1x1xf32>
      %40 = vector.broadcast %39 : f32 to vector<1x8x128xf32>
      %c0_26 = arith.constant 0 : index
      %c0_27 = arith.constant 0 : index
      %c0_28 = arith.constant 0 : index
      %41 = vector.load %arg3[%c0_26, %c0_27, %c0_28] : memref<1x8x128xf32, #tpu.memory_space<vmem>>, vector<1x8x128xf32>
      tpu.vector_store %arg3[%c0_26, %c0_27, %c0_28], %40 {strides = array<i32>} : memref<1x8x128xf32, #tpu.memory_space<vmem>>, vector<1x8x128xf32>,
    } else {
    }
    return
  }
  func.func @transform_0(%arg0: i32, %arg1: i32) -> (i32, i32) {
    %c0_i32 = arith.constant 0 : i32
    return %arg0, %arg1 : i32, i32
  }
  func.func @transform_1(%arg0: i32, %arg1: i32) -> (i32, i32, i32) {
    %c0_i32 = arith.constant 0 : i32
    %c0_i32_0 = arith.constant 0 : i32
    %c0_i32_1 = arith.constant 0 : i32
    return %arg0, %c0_i32, %c0_i32_0 : i32, i32, i32
  }
}

</mosaic_0001>

<llo_original>
// kernel: tpu_custom_call.1
$region0: #{tpu_custom_call.1}
  #allocation0 [shape = 'u32[]', space=smem, size = 0x4, offset = 0x4, fixed_abs, tag = 'smem constant byte address 0x4 - core index']
  #allocation1 [shape = 'u32[144,128]{1,0:T(1,128)}', space=vmem, size = 0x12000, scoped, tag = 'internal scratch']
  #allocation2 [shape = 'f32[8,1]{1,0:T(8,128)}', space=vmem, size = 0x1000, scoped, tag = 'scratch operand']
  #allocation3 [shape = 'f32[8,1]{1,0:T(8,128)}', space=vmem, size = 0x1000, scoped, tag = 'scratch operand']
  #allocation4 [shape = 'f32[8,1]{1,0:T(8,128)}', space=vmem, size = 0x1000, scoped, tag = 'scratch operand']
  %s0 = inlined_call_operand.hbm [shape: f32[8,32], index: 0, kind: input, shape index: {}]
  %s1 = inlined_call_operand.hbm [shape: f32[1,8,128], index: 1, kind: output, shape index: {}]
  %s2 = sld [smem:[#allocation0]]
  $region26: #{tpu_custom_call.1} parent=0
    _
  %s4 = ssub.s32 1, %s2
  %s5 = scalar_select 0, %s4, %s2
  $region1: #{tpu_custom_call.1} parent=0
    #allocation5 [shape = 'u8[4096]{0}', space=vmem, size = 0x1000, scoped, tag = 'input window, operand 0, single buffered']
    #allocation6 [shape = 's32[1]{0}', space=sflag, size = 0x4, scoped, tag = 'scoped memory for tpu_custom_call.1']
    #allocation7 [shape = 's32[1]{0}', space=sflag, size = 0x4, scoped, tag = 'scoped memory for tpu_custom_call.1']
    #allocation8 [shape = 'u8[4096]{0}', space=vmem, size = 0x1000, scoped, tag = 'output window, operand 0, single buffered']
    %6 = vsyncpa [#allocation6], 0
    %7 = vsyncpa [#allocation7], 0
    // Predicated region
    $region2: #{tpu_custom_call.1} parent=1 // pred_check
      _
    $region3: #{tpu_custom_call.1} parent=1 // pred_check_branch
      %9 = sbr.rel (0) target = $region5
    $region4: #{tpu_custom_call.1} parent=1 // pred_region
      %s11 = ssub.s32 128, 128
      %12 = vsyncadd [#allocation6], %s11
      %s14 = sshll.u32 [#allocation5], 4
      %s15 = int_to_ptr.vmem [resolvable:$true] %s14
      %17 = dma.hbm_to_vmem [thread:$0]  %s0, 128, %s15, [#allocation6]
    $region5: #{tpu_custom_call.1} parent=1 // pred_fallthru
      _
    // Predicated region
    $region6: #{tpu_custom_call.1} parent=1 // pred_check
      _
    $region7: #{tpu_custom_call.1} parent=1 // pred_check_branch
      %19 = sbr.rel (0) target = $region9
    $region8: #{tpu_custom_call.1} parent=1 // pred_region
      %20 = dma.done [#allocation6], 128
    $region9: #{tpu_custom_call.1} parent=1 // pred_fallthru
      _
    %p21 = scmp.eq.s32.totalorder 0, 0
    // Predicated region
    $region10: #{tpu_custom_call.1} parent=1 // pred_check
      %p22 = pneg %p21
    $region11: #{tpu_custom_call.1} parent=1 // pred_check_branch
      %24 = sbr.rel (%p22) target = $region13
    $region12: #{tpu_custom_call.1} parent=1 // pred_region
      %vm25 = vcmask 7168
      %26 = vst.msk [vmem:[#allocation2] sm:$0xff] %vm25, -1e+30
      %27 = vst.msk [vmem:[#allocation3] sm:$0xff] %vm25, 0.0
      %28 = vst.msk [vmem:[#allocation4] sm:$0xff] %vm25, 0.0
    $region13: #{tpu_custom_call.1} parent=1 // pred_fallthru
      _
    %v29 = vld [vmem:[#allocation5] sm:$0xff]
    %v30 = vld [vmem:[#allocation2] sm:$0xff]
    %vm31 = vcmask 261120
    %v32 = vsel %vm31, %v29, -inf
    %33 = vmax.xlane.f32.xlu0 %v32
    %v34 = vpop.xlane.xlu0 %33
    %v35 = vmax.f32 %v30, %v34
    %37 = vset.pattern.permute.xlu0 0
    %38 = vperm.xlu0 %37, %v35
    %v39 = vpop.permute.xlu0 %38
    %v41 = vsub.f32 %v29, %v39
    %v42 = vmul.f32 %v41, 1.442695
    %v43 = vpow.pop %v42
    %v44 = vsub.f32 %v30, %v35
    %v45 = vmul.f32 %v44, 1.442695
    %v46 = vpow.pop %v45
    %v47 = vld [vmem:[#allocation3] sm:$0xff]
    %v48 = vmul.f32 %v46, %v47
    %v49 = vsel %vm31, %v43, 0.0
    %50 = vadd.xlane.f32.xlu0 %v49
    %v51 = vpop.xlane.xlu0 %50
    %v52 = vadd.f32 %v48, %v51
    %vm53 = vcmask 7168
    %54 = vst.msk [vmem:[#allocation3] sm:$0xff] %vm53, %v52
    %55 = vst.msk [vmem:[#allocation2] sm:$0xff] %vm53, %v35
    %v56 = vld [vmem:[#allocation4] sm:$0xff]
    %v57 = vsel %vm31, %v29, 0.0
    %58 = vadd.xlane.f32.xlu0 %v57
    %v59 = vpop.xlane.xlu0 %58
    %v60 = vadd.f32 %v56, %v59
    %61 = vst.msk [vmem:[#allocation4] sm:$0xff] %vm53, %v60
    // Predicated region
    $region14: #{tpu_custom_call.1} parent=1 // pred_check
      %p62 = pneg %p21
    $region15: #{tpu_custom_call.1} parent=1 // pred_check_branch
      %64 = sbr.rel (%p62) target = $region17
    $region16: #{tpu_custom_call.1} parent=1 // pred_region
      %v65 = vld [vmem:[#allocation2] sm:$0xff]
      %v66 = vld [vmem:[#allocation3] sm:$0xff]
      %v67 = vlog2.pop %v66
      %v68 = vmul.f32 %v67, 0.6931472
      %v69 = vadd.f32 %v65, %v68
      %v70 = vld [vmem:[#allocation4] sm:$0xff]
      %v71 = vmul.f32 %v70, 0.003125
      %v72 = vsub.f32 %v69, %v71
      %v73 = vsel %vm53, %v72, 0.0
      %74 = vadd.xlane.f32.xlu0 %v73
      %v75 = vpop.xlane.xlu0 %74
      %v76 = vrot.slane %v75, 4
      %v77 = vadd.f32 %v75, %v76
      %v78 = vrot.slane %v77, 2
      %v79 = vadd.f32 %v77, %v78
      %v80 = vrot.slane %v79, 1
      %v81 = vadd.f32 %v79, %v80
      %s82 = vtos %v81
      %v83 = vstv %s82
      %84 = vst [vmem:[#allocation8] sm:$0xff] %v83
    $region17: #{tpu_custom_call.1} parent=1 // pred_fallthru
      _
    // Predicated region
    $region18: #{tpu_custom_call.1} parent=1 // pred_check
      _
    $region19: #{tpu_custom_call.1} parent=1 // pred_check_branch
      %86 = sbr.rel (0) target = $region21
    $region20: #{tpu_custom_call.1} parent=1 // pred_region
      %s88 = ssub.s32 128, 128
      %89 = vsyncadd [#allocation7], %s88
      %s91 = sshll.u32 [#allocation8], 4
      %s92 = int_to_ptr.vmem [resolvable:$true] %s91
      %94 = dma.vmem_to_hbm [thread:$0]  %s92, 128, %s1, [#allocation7]
    $region21: #{tpu_custom_call.1} parent=1 // pred_fallthru
      _
    // Predicated region
    $region22: #{tpu_custom_call.1} parent=1 // pred_check
      _
    $region23: #{tpu_custom_call.1} parent=1 // pred_check_branch
      %96 = sbr.rel (0) target = $region25
    $region24: #{tpu_custom_call.1} parent=1 // pred_region
      %97 = dma.done [#allocation7], 128
    $region25: #{tpu_custom_call.1} parent=1 // pred_fallthru
      _
    %98 = vsyncpa [#allocation6], 1
    %99 = vsyncpa [#allocation7], 1

</llo_original>
